<compile_context>
chip_gen: v5e
topology: v5e:2x2
jax: 0.10.0
libtpu: 0.0.40
codegen_flags: <defaults>
</compile_context>

<pallas_src>
import functools

import jax
import jax.numpy as jnp
import numpy as np
from jax.experimental import pallas as pl
from jax.experimental.pallas import tpu as pltpu

DMODEL = 32
NPARAMS = 3 + 3 + 2 + 1 + 1  # = 10
NPARAMS_PAD = 16             # sublane-aligned row count for the lane-major slab
EPS = 1e-12
BETA = 1.0

# dot_general dimension numbers for A @ B^T (contract last dim of both operands).
_TRANS_B = (((1,), (1,)), ((), ()))


def _elliptical_kernel(rep_ref, dxyt_ref, wpad_ref, bpad_ref,
                       params_ref, bg_ref, *, eps, beta, inv_beta):
    rep = rep_ref[...]                                         # (tile, dmodel)

    # One lane-major matmul: aux[r, n] = sum_d W_pad[r, d] * rep[n, d] + b_pad[r]
    # (rows 10..15 are zero padding).  A @ B^T on the MXU; the transposed big
    # operand may lower to an XLU relayout -- XLU is otherwise idle here.
    aux = jax.lax.dot_general(wpad_ref[...], rep, _TRANS_B,
                              preferred_element_type=jnp.float32) + bpad_ref[...]

    # params: lane-dense (16, tile) store.
    params_ref[...] = aux.astype(params_ref.dtype)

    # background: s = m . dxy + b, then softplus(s, beta)/beta + eps (stable form).
    dxyt = dxyt_ref[...]                                       # (2, tile)
    s = aux[0:1, :] * dxyt[0:1, :] + aux[1:2, :] * dxyt[1:2, :] + aux[2:3, :]
    z = beta * s
    sp = jnp.maximum(z, 0.0) + jnp.log1p(jnp.exp(-jnp.abs(z)))
    bg_ref[...] = (sp * inv_beta + eps).astype(bg_ref.dtype)   # (1, tile)


def _round_up(x, m):
    return ((x + m - 1) // m) * m


def _choose_tile(n, tile_n, min_grid=4):
    """N-tile: multiple of 128, <= requested, and (when N is large enough) small
    enough that the grid has >= min_grid steps so both v7x TensorCores get
    balanced work through the "parallel" grid axis."""
    tile = max(128, min(_round_up(tile_n, 128), _round_up(n, 128)))
    if n >= min_grid * 128:
        tile = min(tile, max(128, _round_up(-(-n // min_grid), 128)))
    return tile


def elliptical_profile_forward(representation, dxy, weight, bias, *,
                               eps=EPS, beta=BETA, tile_n=8192,
                               params_layout="bpn", dxy_cm=None):
    """representation: (B, P, dmodel); dxy: (B, P, 2); weight: (10, dmodel);
    bias: (10,).  Returns (bg, params) with bg: (B, P) and params either
    (B, P, 10) ("bpn", default) or (10, B, P) ("cn", channel-major, no transpose).
    `dxy_cm` (shape (2, B, P) or (2, N)) skips the wrapper-side dxy transpose."""
    B, P, dmodel = representation.shape
    N = B * P
    rep_dtype = representation.dtype

    tile = _choose_tile(N, tile_n)
    n_pad = _round_up(N, tile)
    grid = (n_pad // tile,)

    rep = representation.reshape(N, dmodel)
    if dxy_cm is not None:
        dxy_t = dxy_cm.reshape(2, N).astype(jnp.float32)
    else:
        # One small XLA pass (~16*N bytes); pass dxy_cm= to avoid it entirely.
        dxy_t = dxy.reshape(N, 2).astype(jnp.float32).T        # (2, N) lane-major
    if n_pad != N:
        rep = jnp.pad(rep, ((0, n_pad - N), (0, 0)))
        dxy_t = jnp.pad(dxy_t, ((0, 0), (0, n_pad - N)))

    # Weights, padded to 16 sublane-aligned output rows, resident in VMEM.
    w_pad = jnp.zeros((NPARAMS_PAD, dmodel), rep_dtype).at[:NPARAMS].set(
        weight.astype(rep_dtype))
    b_pad = jnp.zeros((NPARAMS_PAD, 1), jnp.float32).at[:NPARAMS, 0].set(
        bias.astype(jnp.float32))

    # VMEM budget (double-buffered, lane/sublane padding included) + margin for
    # weights / compiler scratch / possible transposed-operand relayout.
    rep_row_bytes = 128 * jnp.dtype(rep_dtype).itemsize        # dmodel lanes pad to 128
    blk_bytes = tile * (rep_row_bytes + 32 + 64 + 32)          # rep + dxy^T + params + bg
    vmem_limit = int(min(max(3 * blk_bytes + (4 << 20), 16 << 20), 64 << 20))

    kernel = functools.partial(_elliptical_kernel, eps=float(eps),
                               beta=float(beta), inv_beta=1.0 / float(beta))

    params_slab, bg_row = pl.pallas_call(
        kernel,
        out_shape=(
            jax.ShapeDtypeStruct((NPARAMS_PAD, n_pad), jnp.float32),
            jax.ShapeDtypeStruct((1, n_pad), jnp.float32),
        ),
        grid_spec=pltpu.PrefetchScalarGridSpec(
            num_scalar_prefetch=0,
            grid=grid,
            in_specs=[
                pl.BlockSpec((tile, dmodel), lambda i: (i, 0)),        # rep tile
                pl.BlockSpec((2, tile), lambda i: (0, i)),             # dxy^T tile
                pl.BlockSpec((NPARAMS_PAD, dmodel), lambda i: (0, 0)), # W_pad (resident)
                pl.BlockSpec((NPARAMS_PAD, 1), lambda i: (0, 0)),      # bias_pad (resident)
            ],
            out_specs=[
                pl.BlockSpec((NPARAMS_PAD, tile), lambda i: (0, i)),   # params (lane-major)
                pl.BlockSpec((1, tile), lambda i: (0, i)),             # bg (lane-major)
            ],
        ),
        compiler_params=pltpu.CompilerParams(
            dimension_semantics=("parallel",),
            vmem_limit_bytes=vmem_limit),
    )(rep, dxy_t, w_pad, b_pad)

    bg = bg_row.reshape(n_pad)[:N].reshape(B, P)
    if params_layout == "cn":
        params = params_slab[:NPARAMS, :N].reshape(NPARAMS, B, P)
    else:
        # Drop-in (B, P, 10) layout: one transpose outside the kernel.  Consumers
        # that can take channel-major should use params_layout="cn" instead.
        params = params_slab[:NPARAMS, :N].T.reshape(B, P, NPARAMS)
    return bg, params


def _reference_forward(representation, dxy, weight, bias, *, eps=EPS, beta=BETA):
    """Pure-JAX reference matching the PyTorch semantics."""
    params = jnp.einsum("bpd,od->bpo", representation.astype(jnp.float32),
                        weight.astype(jnp.float32)) + bias.astype(jnp.float32)
    m = params[..., :2]
    b0 = params[..., 2]
    s = jnp.sum(m * dxy.astype(jnp.float32), axis=-1) + b0
    bg = jax.nn.softplus(beta * s) / beta + eps
    return bg, params


if __name__ == "__main__":
    key = jax.random.PRNGKey(0)
    k_rep, k_dxy, k_w, k_b = jax.random.split(key, 4)

    # Deterministic Linear(dmodel, 10) parameters (kaiming-uniform-like scale).
    bound = 1.0 / np.sqrt(DMODEL)
    weight = jax.random.uniform(k_w, (NPARAMS, DMODEL),
                                minval=-bound, maxval=bound, dtype=jnp.float32)
    bias = jax.random.uniform(k_b, (NPARAMS,),
                              minval=-bound, maxval=bound, dtype=jnp.float32)

    # (2, 64): single exact tile; (3, 50): padded tail; (4, 600): multi-step grid
    # (>= 4 tiles so the v7x two-TC split path is exercised) plus a padded tail.
    for (B, P) in [(2, 64), (3, 50), (4, 600)]:
        representation = jax.random.normal(k_rep, (B, P, DMODEL), dtype=jnp.float32)
        dxy = jax.random.normal(k_dxy, (B, P, 2), dtype=jnp.float32)

        bg, params = elliptical_profile_forward(representation, dxy, weight, bias)
        bg, params = jax.block_until_ready((bg, params))

        bg_ref, params_ref = _reference_forward(representation, dxy, weight, bias)
        np.testing.assert_allclose(np.asarray(params), np.asarray(params_ref),
                                   rtol=1e-5, atol=1e-5)
        np.testing.assert_allclose(np.asarray(bg), np.asarray(bg_ref),
                                   rtol=1e-5, atol=1e-5)

    # Channel-major params fast path (no wrapper transpose on the output).
    B, P = 2, 64
    representation = jax.random.normal(k_rep, (B, P, DMODEL), dtype=jnp.float32)
    dxy = jax.random.normal(k_dxy, (B, P, 2), dtype=jnp.float32)
    bg, params_cm = elliptical_profile_forward(representation, dxy, weight, bias,
                                               params_layout="cn")
    bg, params_cm = jax.block_until_ready((bg, params_cm))
    bg_ref, params_ref = _reference_forward(representation, dxy, weight, bias)
    np.testing.assert_allclose(np.asarray(params_cm),
                               np.asarray(jnp.moveaxis(params_ref, -1, 0)),
                               rtol=1e-5, atol=1e-5)
    np.testing.assert_allclose(np.asarray(bg), np.asarray(bg_ref),
                               rtol=1e-5, atol=1e-5)

    # bf16 representation path (dominant HBM stream halved; weights in rep dtype).
    rep_bf16 = representation.astype(jnp.bfloat16)
    w_bf16 = weight.astype(jnp.bfloat16)
    bg, params = elliptical_profile_forward(rep_bf16, dxy, w_bf16, bias)
    bg, params = jax.block_until_ready((bg, params))
    bg_ref, params_ref = _reference_forward(rep_bf16, dxy, w_bf16, bias)
    np.testing.assert_allclose(np.asarray(params), np.asarray(params_ref),
                               rtol=1e-4, atol=1e-4)
    np.testing.assert_allclose(np.asarray(bg), np.asarray(bg_ref),
                               rtol=1e-4, atol=1e-4)

    print("KERNEL_OK")
</pallas_src>

<mosaic_0001>
module attributes {stable_mosaic.version = 11 : i64} {
  func.func @_elliptical_kernel(%arg0: i32, %arg1: memref<128x32xf32, #tpu.memory_space<vmem>>, %arg2: memref<2x128xf32, #tpu.memory_space<vmem>>, %arg3: memref<16x32xf32, #tpu.memory_space<vmem>>, %arg4: memref<16x1xf32, #tpu.memory_space<vmem>>, %arg5: memref<16x128xf32, #tpu.memory_space<vmem>>, %arg6: memref<1x128xf32, #tpu.memory_space<vmem>>) attributes {dimension_semantics = [#tpu.dimension_semantics<parallel>], iteration_bounds = array<i64: 1>, scalar_prefetch = 0 : i64, scratch_operands = 0 : i64, tpu.core_type = #tpu.core_type<tc>, window_params = [{transform_indices = @transform_0, window_bounds = array<i64: 128, 32>}, {transform_indices = @transform_1, window_bounds = array<i64: 2, 128>}, {pipeline_mode = #tpu.pipeline_mode<synchronous>, transform_indices = @transform_2, window_bounds = array<i64: 16, 32>}, {pipeline_mode = #tpu.pipeline_mode<synchronous>, transform_indices = @transform_3, window_bounds = array<i64: 16, 1>}, {transform_indices = @transform_4, window_bounds = array<i64: 16, 128>}, {transform_indices = @transform_5, window_bounds = array<i64: 1, 128>}]} {
    %c0 = arith.constant 0 : index
    %c0_0 = arith.constant 0 : index
    %0 = vector.load %arg1[%c0, %c0_0] : memref<128x32xf32, #tpu.memory_space<vmem>>, vector<128x32xf32>
    %c0_1 = arith.constant 0 : index
    %c0_2 = arith.constant 0 : index
    %1 = vector.load %arg3[%c0_1, %c0_2] : memref<16x32xf32, #tpu.memory_space<vmem>>, vector<16x32xf32>
    %cst = arith.constant dense<0.000000e+00> : vector<16x128xf32>
    %2 = tpu.matmul %1, %0, %cst {dimension_numbers = #tpu.dot_dimension_numbers<[1], [1], [0], [0], [0, 0, 1, 0], [], []>} : vector<16x32xf32>, vector<128x32xf32>, vector<16x128xf32> -> vector<16x128xf32>
    %c0_3 = arith.constant 0 : index
    %c0_4 = arith.constant 0 : index
    %3 = vector.load %arg4[%c0_3, %c0_4] : memref<16x1xf32, #tpu.memory_space<vmem>>, vector<16x1xf32>
    %4 = vector.broadcast %3 : vector<16x1xf32> to vector<16x128xf32>
    %5 = arith.addf %2, %4 : vector<16x128xf32>
    %c0_5 = arith.constant 0 : index
    %c0_6 = arith.constant 0 : index
    %6 = vector.load %arg5[%c0_5, %c0_6] : memref<16x128xf32, #tpu.memory_space<vmem>>, vector<16x128xf32>
    tpu.vector_store %arg5[%c0_5, %c0_6], %5 {strides = array<i32>} : memref<16x128xf32, #tpu.memory_space<vmem>>, vector<16x128xf32>,
    %c0_7 = arith.constant 0 : index
    %c0_8 = arith.constant 0 : index
    %7 = vector.load %arg2[%c0_7, %c0_8] : memref<2x128xf32, #tpu.memory_space<vmem>>, vector<2x128xf32>
    %8 = vector.extract_strided_slice %5 {offsets = [0, 0], sizes = [1, 128], strides = [1, 1]} : vector<16x128xf32> to vector<1x128xf32>
    %9 = vector.extract_strided_slice %7 {offsets = [0, 0], sizes = [1, 128], strides = [1, 1]} : vector<2x128xf32> to vector<1x128xf32>
    %10 = arith.mulf %8, %9 : vector<1x128xf32>
    %11 = vector.extract_strided_slice %5 {offsets = [1, 0], sizes = [1, 128], strides = [1, 1]} : vector<16x128xf32> to vector<1x128xf32>
    %12 = vector.extract_strided_slice %7 {offsets = [1, 0], sizes = [1, 128], strides = [1, 1]} : vector<2x128xf32> to vector<1x128xf32>
    %13 = arith.mulf %11, %12 : vector<1x128xf32>
    %14 = arith.addf %10, %13 : vector<1x128xf32>
    %15 = vector.extract_strided_slice %5 {offsets = [2, 0], sizes = [1, 128], strides = [1, 1]} : vector<16x128xf32> to vector<1x128xf32>
    %16 = arith.addf %14, %15 : vector<1x128xf32>
    %cst_9 = arith.constant 1.000000e+00 : f32
    %17 = vector.broadcast %cst_9 : f32 to vector<1x128xf32>
    %18 = arith.mulf %17, %16 : vector<1x128xf32>
    %cst_10 = arith.constant 0.000000e+00 : f32
    %19 = vector.broadcast %cst_10 : f32 to vector<1x128xf32>
    %20 = arith.maximumf %18, %19 : vector<1x128xf32>
    %21 = math.absf %18 : vector<1x128xf32>
    %cst_11 = arith.constant 0.000000e+00 : f32
    %22 = vector.broadcast %cst_11 : f32 to vector<1x128xf32>
    %23 = arith.subf %22, %21 : vector<1x128xf32>
    %24 = math.exp %23 : vector<1x128xf32>
    %25 = math.log1p %24 : vector<1x128xf32>
    %26 = arith.addf %20, %25 : vector<1x128xf32>
    %cst_12 = arith.constant 1.000000e+00 : f32
    %27 = vector.broadcast %cst_12 : f32 to vector<1x128xf32>
    %28 = arith.mulf %26, %27 : vector<1x128xf32>
    %cst_13 = arith.constant 9.99999996E-13 : f32
    %29 = vector.broadcast %cst_13 : f32 to vector<1x128xf32>
    %30 = arith.addf %28, %29 : vector<1x128xf32>
    %c0_14 = arith.constant 0 : index
    %c0_15 = arith.constant 0 : index
    %31 = vector.load %arg6[%c0_14, %c0_15] : memref<1x128xf32, #tpu.memory_space<vmem>>, vector<1x128xf32>
    tpu.vector_store %arg6[%c0_14, %c0_15], %30 {strides = array<i32>} : memref<1x128xf32, #tpu.memory_space<vmem>>, vector<1x128xf32>,
    return
  }
  func.func @transform_0(%arg0: i32) -> (i32, i32) {
    %c0_i32 = arith.constant 0 : i32
    %c0_i32_0 = arith.constant 0 : i32
    return %arg0, %c0_i32 : i32, i32
  }
  func.func @transform_1(%arg0: i32) -> (i32, i32) {
    %c0_i32 = arith.constant 0 : i32
    %c0_i32_0 = arith.constant 0 : i32
    return %c0_i32, %arg0 : i32, i32
  }
  func.func @transform_2(%arg0: i32) -> (i32, i32) {
    %c0_i32 = arith.constant 0 : i32
    %c0_i32_0 = arith.constant 0 : i32
    %c0_i32_1 = arith.constant 0 : i32
    return %c0_i32, %c0_i32_0 : i32, i32
  }
  func.func @transform_3(%arg0: i32) -> (i32, i32) {
    %c0_i32 = arith.constant 0 : i32
    %c0_i32_0 = arith.constant 0 : i32
    %c0_i32_1 = arith.constant 0 : i32
    return %c0_i32, %c0_i32_0 : i32, i32
  }
  func.func @transform_4(%arg0: i32) -> (i32, i32) {
    %c0_i32 = arith.constant 0 : i32
    %c0_i32_0 = arith.constant 0 : i32
    return %c0_i32, %arg0 : i32, i32
  }
  func.func @transform_5(%arg0: i32) -> (i32, i32) {
    %c0_i32 = arith.constant 0 : i32
    %c0_i32_0 = arith.constant 0 : i32
    return %c0_i32, %arg0 : i32, i32
  }
}

</mosaic_0001>

<llo_original>
// kernel: tpu_custom_call.1
$region0: #{tpu_custom_call.1}
  #allocation0 [shape = 'u32[]', space=smem, size = 0x4, offset = 0x4, fixed_abs, tag = 'smem constant byte address 0x4 - core index']
  #allocation1 [shape = 'u32[72,128]{1,0:T(1,128)}', space=vmem, size = 0x9000, scoped, tag = 'internal scratch']
  %s0 = inlined_call_operand.vmem [shape: f32[128,32], index: 0, kind: input, shape index: {}]
  %s1 = inlined_call_operand.vmem [shape: f32[2,128], index: 1, kind: input, shape index: {}]
  %s2 = inlined_call_operand.vmem [shape: f32[16,32], index: 2, kind: input, shape index: {}]
  %s3 = inlined_call_operand.vmem [shape: f32[16,1], index: 3, kind: input, shape index: {}]
  %s4 = inlined_call_operand.hbm [shape: f32[16,128], index: 4, kind: output, shape index: {0}]
  %s5 = inlined_call_operand.hbm [shape: f32[1,128], index: 5, kind: output, shape index: {1}]
  %6 = xla_tuple %s4, %s5
  %s7 = sld [smem:[#allocation0]]
  $region34: #{tpu_custom_call.1} parent=0
    _
  %s9 = ssub.s32 1, %s7
  %s10 = scalar_select 0, %s9, %s7
  $region1: #{tpu_custom_call.1} parent=0
    #allocation2 [shape = 'u8[8192]{0}', space=vmem, size = 0x2000, scoped, tag = 'output window, operand 0, single buffered']
    #allocation3 [shape = 's32[1]{0}', space=sflag, size = 0x4, scoped, tag = 'scoped memory for tpu_custom_call.1']
    #allocation4 [shape = 'u8[512]{0}', space=vmem, size = 0x400, scoped, tag = 'output window, operand 1, single buffered']
    #allocation5 [shape = 's32[1]{0}', space=sflag, size = 0x4, scoped, tag = 'scoped memory for tpu_custom_call.1']
    %11 = vsyncpa [#allocation3], 0
    %12 = vsyncpa [#allocation5], 0
    // Predicated region
    $region2: #{tpu_custom_call.1} parent=1 // pred_check
      _
    $region3: #{tpu_custom_call.1} parent=1 // pred_check_branch
      %14 = sbr.rel (0) target = $region5
    $region4: #{tpu_custom_call.1} parent=1 // pred_region
      _
    $region5: #{tpu_custom_call.1} parent=1 // pred_fallthru
      _
    // Predicated region
    $region6: #{tpu_custom_call.1} parent=1 // pred_check
      _
    $region7: #{tpu_custom_call.1} parent=1 // pred_check_branch
      %16 = sbr.rel (0) target = $region9
    $region8: #{tpu_custom_call.1} parent=1 // pred_region
      _
    $region9: #{tpu_custom_call.1} parent=1 // pred_fallthru
      _
    // Predicated region
    $region10: #{tpu_custom_call.1} parent=1 // pred_check
      _
    $region11: #{tpu_custom_call.1} parent=1 // pred_check_branch
      %18 = sbr.rel (0) target = $region13
    $region12: #{tpu_custom_call.1} parent=1 // pred_region
      _
    $region13: #{tpu_custom_call.1} parent=1 // pred_fallthru
      _
    // Predicated region
    $region14: #{tpu_custom_call.1} parent=1 // pred_check
      _
    $region15: #{tpu_custom_call.1} parent=1 // pred_check_branch
      %20 = sbr.rel (0) target = $region17
    $region16: #{tpu_custom_call.1} parent=1 // pred_region
      _
    $region17: #{tpu_custom_call.1} parent=1 // pred_fallthru
      _
    %v21 = vld [vmem:[%s0] sm:$0xff]
    %v22 = vld [vmem:[%s0 + $0x8] sm:$0xff]
    %v23 = vld [vmem:[%s0 + $0x10] sm:$0xff]
    %v24 = vld [vmem:[%s0 + $0x18] sm:$0xff]
    %v25 = vld [vmem:[%s0 + $0x20] sm:$0xff]
    %v26 = vld [vmem:[%s0 + $0x28] sm:$0xff]
    %v27 = vld [vmem:[%s0 + $0x30] sm:$0xff]
    %v28 = vld [vmem:[%s0 + $0x38] sm:$0xff]
    %v29 = vld [vmem:[%s0 + $0x40] sm:$0xff]
    %v30 = vld [vmem:[%s0 + $0x48] sm:$0xff]
    %v31 = vld [vmem:[%s0 + $0x50] sm:$0xff]
    %v32 = vld [vmem:[%s0 + $0x58] sm:$0xff]
    %v33 = vld [vmem:[%s0 + $0x60] sm:$0xff]
    %v34 = vld [vmem:[%s0 + $0x68] sm:$0xff]
    %v35 = vld [vmem:[%s0 + $0x70] sm:$0xff]
    %v36 = vld [vmem:[%s0 + $0x78] sm:$0xff]
    %v37 = vld [vmem:[%s2] sm:$0xff]
    %v38 = vld [vmem:[%s2 + $0x8] sm:$0xff]
    %v39 = vld [vmem:[%s3] sm:$0xff]
    %v40 = vld [vmem:[%s3 + $0x8] sm:$0xff]
    %42 = vset.pattern.permute.xlu0 0
    %43 = vperm.xlu0 %42, %v39
    %v44 = vpop.permute.xlu0 %43
    %47 = vset.pattern.permute.xlu0 0
    %48 = vperm.xlu0 %47, %v40
    %v49 = vpop.permute.xlu0 %48
    %vm51 = vcmask 261120
    %v53 = vsel %vm51, %v37, 0
    %v56 = vsel %vm51, %v38, 0
    %v59 = vsel %vm51, %v21, 0
    %v62 = vsel %vm51, %v22, 0
    %v65 = vsel %vm51, %v23, 0
    %v68 = vsel %vm51, %v24, 0
    %v71 = vsel %vm51, %v25, 0
    %v74 = vsel %vm51, %v26, 0
    %v77 = vsel %vm51, %v27, 0
    %v80 = vsel %vm51, %v28, 0
    %v83 = vsel %vm51, %v29, 0
    %v86 = vsel %vm51, %v30, 0
    %v89 = vsel %vm51, %v31, 0
    %v92 = vsel %vm51, %v32, 0
    %v95 = vsel %vm51, %v33, 0
    %v98 = vsel %vm51, %v34, 0
    %v101 = vsel %vm51, %v35, 0
    %v104 = vsel %vm51, %v36, 0
    %106 = vmatpush.xpose.msra.mxu0 %v104
    %107 = vmatpush.xpose.msra.mxu0 %v101
    %108 = vmatpush.xpose.msra.mxu0 %v98
    %109 = vmatpush.xpose.msra.mxu0 %v95
    %110 = vmatpush.xpose.msra.mxu0 %v92
    %111 = vmatpush.xpose.msra.mxu0 %v89
    %112 = vmatpush.xpose.msra.mxu0 %v86
    %113 = vmatpush.xpose.msra.mxu0 %v83
    %114 = vmatpush.xpose.msra.mxu0 %v80
    %115 = vmatpush.xpose.msra.mxu0 %v77
    %116 = vmatpush.xpose.msra.mxu0 %v74
    %117 = vmatpush.xpose.msra.mxu0 %v71
    %118 = vmatpush.xpose.msra.mxu0 %v68
    %119 = vmatpush.xpose.msra.mxu0 %v65
    %120 = vmatpush.xpose.msra.mxu0 %v62
    %121 = vmatpush.xpose.msra.mxu0 %v59
    %122 = vmatmul.f32.gmra.mxu0 %v53
    %v123 = vpop.f32.mrf.mxu0
    %v124 = vadd.f32 %v44, %v123
    %125 = vmatmul.f32.gmra.mxu0 %v56
    %v126 = vpop.f32.mrf.mxu0
    %v127 = vadd.f32 %v49, %v126
    %128 = vdwg.mxu0
    %129 = vst [vmem:[#allocation2] sm:$0xff] %v124
    %130 = vst [vmem:[#allocation2 + $0x8] sm:$0xff] %v127
    %v131 = vld [vmem:[%s1] sm:$0x3]
    %v132 = vmul.f32 %v124, %v131
    %v134 = vrot.slane %v132, 1
    %v136 = vadd.f32 %v132, %v134
    %v138 = vrot.slane %v124, 2
    %v140 = vadd.f32 %v136, %v138
    %v141 = vmax.f32 %v140, 0.0
    %v142 = vand.u32 2147483647, %v140
    %v143 = vsub.f32 0.0, %v142
    %v144 = vmul.f32 %v143, 1.442695
    %v145 = vpow.pop %v144
    %v146 = vadd.f32 %v145, 1.0
    %v147 = vlog2.pop %v146
    %v148 = vmul.f32 %v147, 0.6931472
    %v149 = vmul.f32 -0.5, %v145
    %v150 = vadd.f32 %v149, 1.0
    %v151 = vmul.f32 %v150, %v145
    %v152 = vand.u32 2147483647, %v145
    %vm153 = vcmp.lt.f32.partialorder %v152, 0.0004427343
    %v154 = vsel %vm153, %v151, %v148
    %v155 = vadd.f32 %v141, %v154
    %v156 = vadd.f32 %v155, 1e-12
    %157 = vst [vmem:[#allocation4] sm:$0x1] %v156
    // Predicated region
    $region18: #{tpu_custom_call.1} parent=1 // pred_check
      _
    $region19: #{tpu_custom_call.1} parent=1 // pred_check_branch
      %159 = sbr.rel (0) target = $region21
    $region20: #{tpu_custom_call.1} parent=1 // pred_region
      %161 = vsyncadd [#allocation3], 0
      %s162 = sshll.u32 [#allocation2], 4
      %s163 = int_to_ptr.vmem [resolvable:$true] %s162
      %s164 = sshll.u32 %s4, 4
      %s165 = int_to_ptr.hbm [resolvable:$true] %s164
      %170 = dma.vmem_to_hbm [thread:$0]  %s163, 256, %s165, [#allocation3], 128, 128, 8
    $region21: #{tpu_custom_call.1} parent=1 // pred_fallthru
      _
    // Predicated region
    $region22: #{tpu_custom_call.1} parent=1 // pred_check
      _
    $region23: #{tpu_custom_call.1} parent=1 // pred_check_branch
      %172 = sbr.rel (0) target = $region25
    $region24: #{tpu_custom_call.1} parent=1 // pred_region
      %174 = vsyncadd [#allocation5], 0
      %s176 = sshll.u32 [#allocation4], 4
      %s177 = int_to_ptr.vmem [resolvable:$true] %s176
      %s178 = sshll.u32 %s5, 4
      %s179 = int_to_ptr.hbm [resolvable:$true] %s178
      %181 = dma.vmem_to_hbm [thread:$0]  %s177, 16, %s179, [#allocation5]
    $region25: #{tpu_custom_call.1} parent=1 // pred_fallthru
      _
    // Predicated region
    $region26: #{tpu_custom_call.1} parent=1 // pred_check
      _
    $region27: #{tpu_custom_call.1} parent=1 // pred_check_branch
      %183 = sbr.rel (0) target = $region29
    $region28: #{tpu_custom_call.1} parent=1 // pred_region
      %185 = dma.done [#allocation3], 256
    $region29: #{tpu_custom_call.1} parent=1 // pred_fallthru
      _
    // Predicated region
    $region30: #{tpu_custom_call.1} parent=1 // pred_check
      _
    $region31: #{tpu_custom_call.1} parent=1 // pred_check_branch
      %187 = sbr.rel (0) target = $region33
    $region32: #{tpu_custom_call.1} parent=1 // pred_region
      %189 = dma.done [#allocation5], 16
    $region33: #{tpu_custom_call.1} parent=1 // pred_fallthru
      _
    %190 = vsyncpa [#allocation3], 1
    %191 = vsyncpa [#allocation5], 1

</llo_original>
